<compile_context>
chip_gen: v6e
topology: v6e:2x2x1
jax: 0.10.0
libtpu: 0.0.40
codegen_flags: <defaults>
</compile_context>

<pallas_src>
import functools

import jax
import jax.numpy as jnp
from jax.experimental import pallas as pl
from jax.experimental.pallas import tpu as pltpu


def _dice_kernel(x_ref, t_ref, *refs, average: str, hw: int, t_hw: int,
                 hw_inner: int):
    """One (batch-block, split, hw-tile) grid step.

    x_ref: (B, C, T) logits block (native dtype; cast to f32 after the DMA)
    t_ref: (B, 1, T) integer labels block (native int dtype)
    outputs (written at the last hw step of each (batch, split)):
      micro: inter_out (B, 1, 1, 1)
      macro: inter_out (B, 1, C, 1), card_out (B, 1, C, 1)
    scratch:
      micro: inter_acc (B, 1, 1)
      macro: inter_acc (B, C, 1), card_acc (B, C, 1)
    """
    if average == "micro":
        inter_out, inter_acc = refs
        card_out = card_acc = None
    else:
        inter_out, card_out, inter_acc, card_acc = refs

    s = pl.program_id(1)
    h = pl.program_id(2)
    last = pl.num_programs(2) - 1

    @pl.when(h == 0)
    def _():
        inter_acc[...] = jnp.zeros_like(inter_acc)
        if card_acc is not None:
            card_acc[...] = jnp.zeros_like(card_acc)

    x = x_ref[...].astype(jnp.float32)                     # (B, C, T)
    t = t_ref[...].astype(jnp.int32)                       # (B, 1, T)
    _, c, tile = x.shape

    # Lane-validity mask: the logical global pixel index must be < H*W.  This
    # replaces the wrapper-side jnp.pad (extra HBM round-trip) and also
    # neutralizes the redundant clamped tile created by the HW split.  All
    # garbage (out-of-bounds) lanes are blocked by selects before any
    # reduction, so NaN/Inf from garbage logits/labels cannot leak.
    base = (s * hw_inner + h) * t_hw
    lane = jax.lax.broadcasted_iota(jnp.int32, (1, 1, tile), 2)
    valid = (base + lane) < hw                             # (1, 1, T)

    # Numerically-stable softmax pieces over the class (sublane) axis; the
    # per-pixel columns are independent, so garbage lanes stay isolated.
    m = jnp.max(x, axis=1, keepdims=True)                  # (B, 1, T)
    e = jnp.exp(x - m)                                     # (B, C, T)
    ssum = jnp.sum(e, axis=1, keepdims=True)               # (B, 1, T)
    # Exact reciprocal: a (B,1,T) divide is 1/C of a full (B,C,T) divide.
    # (pl.reciprocal(approx=True) would move it to the EUP but costs ~1e-4
    # relative accuracy; not worth it for a loss reduction.)
    inv_s = 1.0 / ssum

    class_ids = jax.lax.broadcasted_iota(jnp.int32, (1, c, 1), 1)
    true_mask = (class_ids == t) & valid                   # (B, C, T)

    if average == "micro":
        # Only the softmax probability of the true class contributes; the
        # micro cardinality is exactly 2*H*W and is applied in JAX.
        e_true = jnp.sum(jnp.where(true_mask, e, 0.0), axis=1, keepdims=True)
        pix = jnp.where(valid, e_true * inv_s, 0.0)        # select blocks NaN
        inter_acc[...] += jnp.sum(pix, axis=2, keepdims=True)
    else:
        soft = e * inv_s                                                    # (B,C,T)
        inter_acc[...] += jnp.sum(jnp.where(true_mask, soft, 0.0),
                                  axis=2, keepdims=True)                    # (B,C,1)
        # Fused cardinality contribution: softmax + one-hot folded into a
        # single select chain and a single lane reduction (no separate
        # `count` pass -> fewer VPU passes, matters on v7x).
        card = jnp.where(true_mask, soft + 1.0, jnp.where(valid, soft, 0.0))
        card_acc[...] += jnp.sum(card, axis=2, keepdims=True)               # (B,C,1)

    @pl.when(h == last)
    def _():
        inter_out[...] = inter_acc[...].reshape(inter_out.shape)
        if card_out is not None:
            card_out[...] = card_acc[...].reshape(card_out.shape)


def dice_loss_pallas(logits, target, average: str = "micro", eps: float = 1e-8,
                     max_lanes_per_tile: int | None = None):
    """Pallas implementation of kornia dice_loss.

    logits: (N, C, H, W) float (any float dtype; cast to f32 inside the kernel)
    target: (N, H, W) integer class labels in [0, C)
    returns: scalar float32 loss
    """
    assert logits.ndim == 4, f"expected NCHW logits, got {logits.shape}"
    assert average in ("micro", "macro")
    N, C, H, W = logits.shape
    assert target.shape == (N, H, W)
    HW = H * W

    x = logits.reshape(N, C, HW)                    # native float dtype, no pad
    t = target
    # Keep narrow integer label dtypes (int8/int16/int32) as-is; only widen
    # unsupported ones.  Narrow labels cut label HBM traffic up to 4x.
    if (not jnp.issubdtype(t.dtype, jnp.integer)) or jnp.dtype(t.dtype).itemsize > 4:
        t = t.astype(jnp.int32)
    t = t.reshape(N, 1, HW)

    LANE = 128
    x_item = jnp.dtype(x.dtype).itemsize
    t_item = jnp.dtype(t.dtype).itemsize
    hw_lanes = pl.cdiv(HW, LANE) * LANE

    # ---- generation-aware VMEM budget (v7x: 64 MiB/TC; v5e/v6e: 128 MiB) ----
    try:
        info = pltpu.get_tpu_info()
        vmem_cap = int(getattr(info, "vmem_capacity_bytes", 128 << 20))
    except Exception:  # off-TPU tracing / older API
        vmem_cap = 128 << 20
    target_bytes = (24 << 20) if vmem_cap <= (80 << 20) else (32 << 20)

    # Working-set bytes per lane column per image:
    #   2x double-buffered logits + 2x double-buffered labels
    #   + ~3 full-tile f32 temporaries (x_f32/e, soft, select temp)
    per_lane = 2 * C * x_item + 2 * t_item + 3 * C * 4
    budget_lanes = max(LANE, (target_bytes // per_lane) // LANE * LANE)
    if max_lanes_per_tile is not None:               # test/tuning hook
        budget_lanes = max(LANE, min(budget_lanes,
                                     (max_lanes_per_tile // LANE) * LANE))

    t_hw = min(hw_lanes, budget_lanes)               # lane-aligned tile width
    num_hw = pl.cdiv(HW, t_hw)

    # Fold several images into one block when a whole image fits in one tile
    # (amortizes the fixed per-grid-step cost for small images / big batches).
    b_blk = max(1, min(N, budget_lanes // t_hw)) if num_hw == 1 else 1
    nb = pl.cdiv(N, b_blk)

    # Megacore split of the HW reduction (helps v7x when N is small); only
    # when the possible redundant clamped tile is a small fraction of work.
    n_split = 2 if (num_hw >= 2 and (num_hw % 2 == 0 or num_hw >= 16)) else 1
    hw_inner = pl.cdiv(num_hw, n_split)
    max_hw_block = num_hw - 1

    def in_map(b, s, h):
        # Clamp so a redundant split tile re-reads the last real block; its
        # contribution is zeroed by the in-kernel lane-validity mask.
        return (b, 0, jnp.minimum(s * hw_inner + h, max_hw_block))

    def out_map(b, s, h):
        return (b, s, 0, 0)

    if average == "micro":
        out_shape = jax.ShapeDtypeStruct((N, n_split, 1, 1), jnp.float32)
        out_specs = pl.BlockSpec((b_blk, 1, 1, 1), out_map)
        scratch = [pltpu.VMEM((b_blk, 1, 1), jnp.float32)]
    else:
        out_shape = (jax.ShapeDtypeStruct((N, n_split, C, 1), jnp.float32),
                     jax.ShapeDtypeStruct((N, n_split, C, 1), jnp.float32))
        out_specs = (pl.BlockSpec((b_blk, 1, C, 1), out_map),
                     pl.BlockSpec((b_blk, 1, C, 1), out_map))
        scratch = [pltpu.VMEM((b_blk, C, 1), jnp.float32),
                   pltpu.VMEM((b_blk, C, 1), jnp.float32)]

    vmem_limit = int(min(max(target_bytes + (8 << 20), 16 << 20),
                         int(0.9 * vmem_cap)))

    kernel = functools.partial(_dice_kernel, average=average, hw=HW,
                               t_hw=t_hw, hw_inner=hw_inner)

    res = pl.pallas_call(
        kernel,
        out_shape=out_shape,
        grid_spec=pltpu.PrefetchScalarGridSpec(
            num_scalar_prefetch=0,
            grid=(nb, n_split, hw_inner),           # reduction (hw) axis last
            in_specs=[pl.BlockSpec((b_blk, C, t_hw), in_map),
                      pl.BlockSpec((b_blk, 1, t_hw), in_map)],
            out_specs=out_specs,
            scratch_shapes=scratch,
        ),
        compiler_params=pltpu.CompilerParams(
            dimension_semantics=("parallel", "parallel", "arbitrary"),
            vmem_limit_bytes=vmem_limit,
        ),
    )(x, t)

    # Tiny finalize in JAX (per-batch/per-split partials -> scalar loss).
    eps = float(eps)
    if average == "micro":
        inter = jnp.sum(res, axis=(1, 2, 3))                   # (N,)
        dice = 2.0 * inter / (2.0 * float(HW) + eps)
        return jnp.mean(1.0 - dice)
    else:
        inter_p, card_p = res
        inter = jnp.sum(inter_p[..., 0], axis=1)               # (N, C)
        card = jnp.sum(card_p[..., 0], axis=1)                 # (N, C)
        dice = 2.0 * inter / (card + eps)
        return jnp.mean(1.0 - dice)


def dice_loss_ref(logits, target, average: str = "micro", eps: float = 1e-8):
    """Pure-JAX reference mirroring the PyTorch semantics."""
    soft = jax.nn.softmax(logits.astype(jnp.float32), axis=1)            # (N,C,H,W)
    onehot = jax.nn.one_hot(target, logits.shape[1], dtype=jnp.float32)  # (N,H,W,C)
    onehot = jnp.transpose(onehot, (0, 3, 1, 2))                         # (N,C,H,W)
    dims = (1, 2, 3) if average == "micro" else (2, 3)
    inter = jnp.sum(soft * onehot, axis=dims)
    card = jnp.sum(soft + onehot, axis=dims)
    dice = 2.0 * inter / (card + eps)
    return jnp.mean(1.0 - dice)


class DiceLoss:
    """Stateless criterion matching kornia's DiceLoss module (no parameters)."""

    def __init__(self, average: str = "micro", eps: float = 1e-8) -> None:
        self.average = average
        self.eps = eps

    def __call__(self, logits, target):
        return dice_loss_pallas(logits, target, self.average, self.eps)


if __name__ == "__main__":
    def make(key, n, c, h, w, x_dtype=jnp.float32, t_dtype=jnp.int32):
        kx, kt = jax.random.split(key)
        x = jax.random.normal(kx, (n, c, h, w), dtype=jnp.float32).astype(x_dtype)
        t = jax.random.randint(kt, (n, h, w), 0, c, dtype=jnp.int32).astype(t_dtype)
        return x, t

    def check(logits, target, avg, **kw):
        out = jax.block_until_ready(dice_loss_pallas(logits, target, avg, 1e-8, **kw))
        ref = jax.block_until_ready(dice_loss_ref(logits, target, avg, 1e-8))
        assert jnp.allclose(out, ref, atol=1e-5, rtol=1e-5), (avg, kw, out, ref)

    keys = jax.random.split(jax.random.PRNGKey(0), 6)

    # A) base shapes (module-scale); also exercise the class interface.
    x, t = make(keys[0], 2, 4, 16, 16)
    crit = DiceLoss(average="micro", eps=1e-8)
    loss = jax.block_until_ready(crit(x, t))
    ref = jax.block_until_ready(dice_loss_ref(x, t, "micro", 1e-8))
    assert jnp.allclose(loss, ref, atol=1e-5, rtol=1e-5), (loss, ref)
    check(x, t, "macro")

    # B) odd shapes: partial lane tile (HW=63) + class count not multiple of 8.
    x, t = make(keys[1], 2, 5, 7, 9)
    check(x, t, "micro")
    check(x, t, "macro")

    # C) forced multi-tile + HW split + partial last HW tile (HW=500, 4 tiles).
    x, t = make(keys[2], 2, 4, 10, 50)
    check(x, t, "micro", max_lanes_per_tile=128)
    check(x, t, "macro", max_lanes_per_tile=128)

    # D) batch folding with a partial (out-of-bounds) batch block (N=3, b_blk=2).
    x, t = make(keys[3], 3, 4, 8, 16)
    check(x, t, "micro", max_lanes_per_tile=256)

    # E) native bf16 logits + int8 labels (reduced-HBM-traffic path).
    x, t = make(keys[4], 2, 4, 16, 16, x_dtype=jnp.bfloat16, t_dtype=jnp.int8)
    check(x, t, "micro")

    # F) odd tile count with a clamped redundant split tile (num_hw=17, N=1).
    x, t = make(keys[5], 1, 4, 17, 128)
    check(x, t, "micro", max_lanes_per_tile=128)

    print("KERNEL_OK")
</pallas_src>

<mosaic_0001>
module attributes {stable_mosaic.version = 11 : i64} {
  func.func @_dice_kernel(%arg0: i32, %arg1: i32, %arg2: i32, %arg3: memref<2x4x256xf32, #tpu.memory_space<vmem>>, %arg4: memref<2x1x256xi32, #tpu.memory_space<vmem>>, %arg5: memref<2x1x1x1xf32, #tpu.memory_space<vmem>>, %arg6: memref<2x1x1xf32, #tpu.memory_space<vmem>>) attributes {dimension_semantics = [#tpu.dimension_semantics<parallel>, #tpu.dimension_semantics<parallel>, #tpu.dimension_semantics<arbitrary>], iteration_bounds = array<i64: 1, 1, 1>, scalar_prefetch = 0 : i64, scratch_operands = 1 : i64, tpu.core_type = #tpu.core_type<tc>, window_params = [{transform_indices = @transform_0, window_bounds = array<i64: 2, 4, 256>}, {transform_indices = @transform_1, window_bounds = array<i64: 2, 1, 256>}, {transform_indices = @transform_2, window_bounds = array<i64: 2, 1, 1, 1>}]} {
    %c0_i32 = arith.constant 0 : i32
    %0 = arith.cmpi eq, %arg2, %c0_i32 : i32
    %1 = arith.extui %0 : i1 to i32
    %c0_i32_0 = arith.constant 0 : i32
    %2 = arith.cmpi ne, %1, %c0_i32_0 : i32
    scf.if %2 {
      %cst_21 = arith.constant 0.000000e+00 : f32
      %45 = vector.broadcast %cst_21 : f32 to vector<2x1x1xf32>
      %c0_22 = arith.constant 0 : index
      %c0_23 = arith.constant 0 : index
      %c0_24 = arith.constant 0 : index
      %46 = vector.load %arg6[%c0_22, %c0_23, %c0_24] : memref<2x1x1xf32, #tpu.memory_space<vmem>>, vector<2x1x1xf32>
      tpu.vector_store %arg6[%c0_22, %c0_23, %c0_24], %45 {strides = array<i32>} : memref<2x1x1xf32, #tpu.memory_space<vmem>>, vector<2x1x1xf32>,
    } else {
    }
    %c0 = arith.constant 0 : index
    %c0_1 = arith.constant 0 : index
    %c0_2 = arith.constant 0 : index
    %3 = vector.load %arg3[%c0, %c0_1, %c0_2] : memref<2x4x256xf32, #tpu.memory_space<vmem>>, vector<2x4x256xf32>
    %c0_3 = arith.constant 0 : index
    %c0_4 = arith.constant 0 : index
    %c0_5 = arith.constant 0 : index
    %4 = vector.load %arg4[%c0_3, %c0_4, %c0_5] : memref<2x1x256xi32, #tpu.memory_space<vmem>>, vector<2x1x256xi32>
    %c1_i32 = arith.constant 1 : i32
    %5 = arith.muli %arg1, %c1_i32 : i32
    %6 = arith.addi %5, %arg2 : i32
    %c256_i32 = arith.constant 256 : i32
    %7 = arith.muli %6, %c256_i32 : i32
    %8 = tpu.iota {dimensions = array<i32: 2>} : vector<1x1x256xi32>
    %9 = vector.broadcast %7 : i32 to vector<1x1x256xi32>
    %10 = arith.addi %9, %8 : vector<1x1x256xi32>
    %c256_i32_6 = arith.constant 256 : i32
    %11 = vector.broadcast %c256_i32_6 : i32 to vector<1x1x256xi32>
    %12 = arith.cmpi slt, %10, %11 : vector<1x1x256xi32>
    %cst = arith.constant dense<0xFF800000> : vector<2x256xf32>
    %13 = vector.multi_reduction <maximumf>, %3, %cst [1] : vector<2x4x256xf32> to vector<2x256xf32>
    %14 = vector.shape_cast %13 : vector<2x256xf32> to vector<2x1x256xf32>
    %15 = vector.broadcast %14 : vector<2x1x256xf32> to vector<2x4x256xf32>
    %16 = arith.subf %3, %15 : vector<2x4x256xf32>
    %17 = math.exp %16 : vector<2x4x256xf32>
    %cst_7 = arith.constant dense<0.000000e+00> : vector<2x256xf32>
    %18 = vector.multi_reduction <add>, %17, %cst_7 [1] : vector<2x4x256xf32> to vector<2x256xf32>
    %19 = vector.shape_cast %18 : vector<2x256xf32> to vector<2x1x256xf32>
    %cst_8 = arith.constant 1.000000e+00 : f32
    %20 = vector.broadcast %cst_8 : f32 to vector<2x1x256xf32>
    %21 = arith.divf %20, %19 : vector<2x1x256xf32>
    %22 = tpu.iota {dimensions = array<i32: 1>} : vector<1x4x1xi32>
    %23 = vector.broadcast %22 : vector<1x4x1xi32> to vector<2x4x256xi32>
    %24 = vector.broadcast %4 : vector<2x1x256xi32> to vector<2x4x256xi32>
    %25 = arith.cmpi eq, %23, %24 : vector<2x4x256xi32>
    %26 = vector.broadcast %12 : vector<1x1x256xi1> to vector<2x4x256xi1>
    %27 = arith.andi %25, %26 : vector<2x4x256xi1>
    %cst_9 = arith.constant 0.000000e+00 : f32
    %28 = vector.broadcast %cst_9 : f32 to vector<2x4x256xf32>
    %29 = arith.select %27, %17, %28 : vector<2x4x256xi1>, vector<2x4x256xf32>
    %cst_10 = arith.constant dense<0.000000e+00> : vector<2x256xf32>
    %30 = vector.multi_reduction <add>, %29, %cst_10 [1] : vector<2x4x256xf32> to vector<2x256xf32>
    %31 = vector.shape_cast %30 : vector<2x256xf32> to vector<2x1x256xf32>
    %32 = arith.mulf %31, %21 : vector<2x1x256xf32>
    %cst_11 = arith.constant 0.000000e+00 : f32
    %33 = vector.shape_cast %12 : vector<1x1x256xi1> to vector<1x1x256xi1>
    %34 = vector.broadcast %33 : vector<1x1x256xi1> to vector<2x1x256xi1>
    %35 = vector.broadcast %cst_11 : f32 to vector<2x1x256xf32>
    %36 = arith.select %34, %32, %35 : vector<2x1x256xi1>, vector<2x1x256xf32>
    %c0_12 = arith.constant 0 : index
    %c0_13 = arith.constant 0 : index
    %c0_14 = arith.constant 0 : index
    %37 = vector.load %arg6[%c0_12, %c0_13, %c0_14] : memref<2x1x1xf32, #tpu.memory_space<vmem>>, vector<2x1x1xf32>
    %cst_15 = arith.constant dense<0.000000e+00> : vector<2x1xf32>
    %38 = vector.multi_reduction <add>, %36, %cst_15 [2] : vector<2x1x256xf32> to vector<2x1xf32>
    %39 = vector.shape_cast %38 : vector<2x1xf32> to vector<2x1x1xf32>
    %40 = arith.addf %37, %39 : vector<2x1x1xf32>
    %c0_16 = arith.constant 0 : index
    %c0_17 = arith.constant 0 : index
    %c0_18 = arith.constant 0 : index
    %41 = vector.load %arg6[%c0_16, %c0_17, %c0_18] : memref<2x1x1xf32, #tpu.memory_space<vmem>>, vector<2x1x1xf32>
    tpu.vector_store %arg6[%c0_16, %c0_17, %c0_18], %40 {strides = array<i32>} : memref<2x1x1xf32, #tpu.memory_space<vmem>>, vector<2x1x1xf32>,
    %c0_i32_19 = arith.constant 0 : i32
    %42 = arith.cmpi eq, %arg2, %c0_i32_19 : i32
    %43 = arith.extui %42 : i1 to i32
    %c0_i32_20 = arith.constant 0 : i32
    %44 = arith.cmpi ne, %43, %c0_i32_20 : i32
    scf.if %44 {
      %c0_21 = arith.constant 0 : index
      %c0_22 = arith.constant 0 : index
      %c0_23 = arith.constant 0 : index
      %45 = vector.load %arg6[%c0_21, %c0_22, %c0_23] : memref<2x1x1xf32, #tpu.memory_space<vmem>>, vector<2x1x1xf32>
      %46 = vector.shape_cast %45 : vector<2x1x1xf32> to vector<2x1x1x1xf32>
      %c0_24 = arith.constant 0 : index
      %c0_25 = arith.constant 0 : index
      %c0_26 = arith.constant 0 : index
      %c0_27 = arith.constant 0 : index
      %47 = vector.load %arg5[%c0_24, %c0_25, %c0_26, %c0_27] : memref<2x1x1x1xf32, #tpu.memory_space<vmem>>, vector<2x1x1x1xf32>
      tpu.vector_store %arg5[%c0_24, %c0_25, %c0_26, %c0_27], %46 {strides = array<i32>} : memref<2x1x1x1xf32, #tpu.memory_space<vmem>>, vector<2x1x1x1xf32>,
    } else {
    }
    return
  }
  func.func @transform_0(%arg0: i32, %arg1: i32, %arg2: i32) -> (i32, i32, i32) {
    %c1_i32 = arith.constant 1 : i32
    %0 = arith.muli %arg1, %c1_i32 : i32
    %1 = arith.addi %0, %arg2 : i32
    %c0_i32 = arith.constant 0 : i32
    %2 = arith.minsi %1, %c0_i32 : i32
    %c0_i32_0 = arith.constant 0 : i32
    %c0_i32_1 = arith.constant 0 : i32
    return %arg0, %c0_i32_0, %2 : i32, i32, i32
  }
  func.func @transform_1(%arg0: i32, %arg1: i32, %arg2: i32) -> (i32, i32, i32) {
    %c1_i32 = arith.constant 1 : i32
    %0 = arith.muli %arg1, %c1_i32 : i32
    %1 = arith.addi %0, %arg2 : i32
    %c0_i32 = arith.constant 0 : i32
    %2 = arith.minsi %1, %c0_i32 : i32
    %c0_i32_0 = arith.constant 0 : i32
    %c0_i32_1 = arith.constant 0 : i32
    return %arg0, %c0_i32_0, %2 : i32, i32, i32
  }
  func.func @transform_2(%arg0: i32, %arg1: i32, %arg2: i32) -> (i32, i32, i32, i32) {
    %c0_i32 = arith.constant 0 : i32
    %c0_i32_0 = arith.constant 0 : i32
    %c0_i32_1 = arith.constant 0 : i32
    return %arg0, %arg1, %c0_i32, %c0_i32_0 : i32, i32, i32, i32
  }
}

</mosaic_0001>

<llo_original>
// kernel: tpu_custom_call.1
$region0: #{tpu_custom_call.1}
  #allocation0 [shape = 'u32[]', space=smem, size = 0x4, offset = 0x4, fixed_abs, tag = 'smem constant byte address 0x4 - core index']
  #allocation1 [shape = 'u32[144,128]{1,0:T(1,128)}', space=vmem, size = 0x12000, scoped, tag = 'internal scratch']
  #allocation2 [shape = 'f32[2,1,1]{2,1,0:T(1,128)}', space=vmem, size = 0x400, scoped, tag = 'scratch operand']
  %s0 = inlined_call_operand.hbm [shape: f32[2,4,256], index: 0, kind: input, shape index: {}]
  %s1 = inlined_call_operand.hbm [shape: s32[2,1,256], index: 1, kind: input, shape index: {}]
  %s2 = inlined_call_operand.vmem [shape: f32[2,1,1,1], index: 2, kind: output, shape index: {}]
  %s3 = sld [smem:[#allocation0]]
  $region34: #{tpu_custom_call.1} parent=0
    _
  %s5 = ssub.s32 1, %s3
  %s6 = scalar_select 0, %s5, %s3
  $region1: #{tpu_custom_call.1} parent=0
    #allocation3 [shape = 'u8[8192]{0}', space=vmem, size = 0x2000, scoped, tag = 'input window, operand 0, single buffered']
    #allocation4 [shape = 's32[1]{0}', space=sflag, size = 0x4, scoped, tag = 'scoped memory for tpu_custom_call.1']
    #allocation5 [shape = 'u8[2048]{0}', space=vmem, size = 0x800, scoped, tag = 'input window, operand 1, single buffered']
    #allocation6 [shape = 's32[1]{0}', space=sflag, size = 0x4, scoped, tag = 'scoped memory for tpu_custom_call.1']
    %7 = vsyncpa [#allocation4], 0
    %8 = vsyncpa [#allocation6], 0
    // Predicated region
    $region2: #{tpu_custom_call.1} parent=1 // pred_check
      _
    $region3: #{tpu_custom_call.1} parent=1 // pred_check_branch
      %10 = sbr.rel (0) target = $region5
    $region4: #{tpu_custom_call.1} parent=1 // pred_region
      %s11 = sadd.s32 0, 0
      %p12 = scmp.lt.s32.totalorder %s11, 0
      %s13 = scalar_select %p12, %s11, 0
      %s14 = smul.u32 2, %s13
      %s16 = ssub.s32 256, 256
      %17 = vsyncadd [#allocation4], %s16
      %s18 = smul.addr %s14, 64
      %s19 = scalar_lea.hbm %s0, %s18
      %s20 = sshll.u32 [#allocation3], 4
      %s21 = int_to_ptr.vmem [resolvable:$true] %s20
      %26 = dma.hbm_to_vmem [thread:$0]  %s19, 256, %s21, [#allocation4], 128, 128, 8
    $region5: #{tpu_custom_call.1} parent=1 // pred_fallthru
      _
    // Predicated region
    $region6: #{tpu_custom_call.1} parent=1 // pred_check
      _
    $region7: #{tpu_custom_call.1} parent=1 // pred_check_branch
      %28 = sbr.rel (0) target = $region9
    $region8: #{tpu_custom_call.1} parent=1 // pred_region
      %s29 = sadd.s32 0, 0
      %p30 = scmp.lt.s32.totalorder %s29, 0
      %s31 = scalar_select %p30, %s29, 0
      %s32 = smul.u32 2, %s31
      %s34 = ssub.s32 64, 64
      %35 = vsyncadd [#allocation6], %s34
      %s36 = smul.addr %s32, 16
      %s37 = scalar_lea.hbm %s1, %s36
      %s38 = sshll.u32 [#allocation5], 4
      %s39 = int_to_ptr.vmem [resolvable:$true] %s38
      %44 = dma.hbm_to_vmem [thread:$0]  %s37, 64, %s39, [#allocation6], 32, 32, 2
    $region9: #{tpu_custom_call.1} parent=1 // pred_fallthru
      _
    // Predicated region
    $region10: #{tpu_custom_call.1} parent=1 // pred_check
      _
    $region11: #{tpu_custom_call.1} parent=1 // pred_check_branch
      %46 = sbr.rel (0) target = $region13
    $region12: #{tpu_custom_call.1} parent=1 // pred_region
      %47 = dma.done [#allocation4], 256
    $region13: #{tpu_custom_call.1} parent=1 // pred_fallthru
      _
    // Predicated region
    $region14: #{tpu_custom_call.1} parent=1 // pred_check
      _
    $region15: #{tpu_custom_call.1} parent=1 // pred_check_branch
      %49 = sbr.rel (0) target = $region17
    $region16: #{tpu_custom_call.1} parent=1 // pred_region
      %50 = dma.done [#allocation6], 64
    $region17: #{tpu_custom_call.1} parent=1 // pred_fallthru
      _
    %s51 = sadd.s32 0, 0
    %p52 = scmp.lt.s32.totalorder %s51, 0
    %s53 = scalar_select %p52, %s51, 0
    %s54 = smul.u32 2, %s53
    %s55 = sadd.s32 0, 0
    %p56 = scmp.lt.s32.totalorder %s55, 0
    %s57 = scalar_select %p56, %s55, 0
    %s58 = smul.u32 2, %s57
    %p59 = scmp.eq.s32.totalorder 0, 0
    // Predicated region
    $region18: #{tpu_custom_call.1} parent=1 // pred_check
      %p60 = pneg %p59
    $region19: #{tpu_custom_call.1} parent=1 // pred_check_branch
      %62 = sbr.rel (%p60) target = $region21
    $region20: #{tpu_custom_call.1} parent=1 // pred_region
      %vm63 = vcmask 0
      %64 = vst.msk [vmem:[#allocation2] sm:$0x1] %vm63, 0.0
      %65 = vst.msk [vmem:[#allocation2 + $0x1] sm:$0x1] %vm63, 0.0
    $region21: #{tpu_custom_call.1} parent=1 // pred_fallthru
      _
    %v66 = vld [vmem:[#allocation3] sm:$0xff]
    %v67 = vld [vmem:[#allocation3 + $0x8] sm:$0xff]
    %v68 = vld [vmem:[#allocation5] sm:$0x3]
    %v69 = vld [vmem:[#allocation5 + $0x2] sm:$0x3]
    %s70 = sadd.s32 0, 0
    %s71 = smul.u32 %s70, 256
    %v72 = vlaneseq
    %v73 = vand.u32 %v72, 127
    %v74 = vadd.s32 %v73, 128
    %v75 = vstv %s71
    %v76 = vadd.s32 %v75, %v73
    %v77 = vadd.s32 %v75, %v74
    %vm78 = vcmp.lt.s32.totalorder %v76, 256
    %vm79 = vcmp.lt.s32.totalorder %v77, 256
    %v82 = vcombine.high %v66, %v66
    %v83 = vcombine.high %v67, %v67
    %vm86 = vcmask 1043456
    %v87 = vsel %vm86, %v66, -inf
    %v88 = vrot.slane %v87, 4
    %v89 = vmax.f32 %v87, %v88
    %v90 = vrot.slane %v89, 2
    %v91 = vmax.f32 %v89, %v90
    %v92 = vrot.slane %v91, 1
    %v93 = vmax.f32 %v91, %v92
    %v94 = vsel %vm86, %v82, -inf
    %v95 = vrot.slane %v94, 4
    %v96 = vmax.f32 %v94, %v95
    %v97 = vrot.slane %v96, 2
    %v98 = vmax.f32 %v96, %v97
    %v99 = vrot.slane %v98, 1
    %v100 = vmax.f32 %v98, %v99
    %v101 = vsel %vm86, %v67, -inf
    %v102 = vrot.slane %v101, 4
    %v103 = vmax.f32 %v101, %v102
    %v104 = vrot.slane %v103, 2
    %v105 = vmax.f32 %v103, %v104
    %v106 = vrot.slane %v105, 1
    %v107 = vmax.f32 %v105, %v106
    %v108 = vsel %vm86, %v83, -inf
    %v109 = vrot.slane %v108, 4
    %v110 = vmax.f32 %v108, %v109
    %v111 = vrot.slane %v110, 2
    %v112 = vmax.f32 %v110, %v111
    %v113 = vrot.slane %v112, 1
    %v114 = vmax.f32 %v112, %v113
    %v119 = vcombine.low %v93, %v100
    %v120 = vcombine.low %v107, %v114
    %v123 = vsub.f32 %v66, %v119
    %v124 = vsub.f32 %v67, %v120
    %v125 = vmul.f32 %v123, 1.442695
    %v126 = vpow.pop %v125
    %v127 = vmul.f32 %v124, 1.442695
    %v128 = vpow.pop %v127
    %v131 = vcombine.high %v126, %v126
    %v132 = vcombine.high %v128, %v128
    %v135 = vsel %vm86, %v126, 0.0
    %v136 = vrot.slane %v135, 4
    %v137 = vadd.f32 %v135, %v136
    %v138 = vrot.slane %v137, 2
    %v139 = vadd.f32 %v137, %v138
    %v140 = vrot.slane %v139, 1
    %v141 = vadd.f32 %v139, %v140
    %v142 = vsel %vm86, %v131, 0.0
    %v143 = vrot.slane %v142, 4
    %v144 = vadd.f32 %v142, %v143
    %v145 = vrot.slane %v144, 2
    %v146 = vadd.f32 %v144, %v145
    %v147 = vrot.slane %v146, 1
    %v148 = vadd.f32 %v146, %v147
    %v149 = vsel %vm86, %v128, 0.0
    %v150 = vrot.slane %v149, 4
    %v151 = vadd.f32 %v149, %v150
    %v152 = vrot.slane %v151, 2
    %v153 = vadd.f32 %v151, %v152
    %v154 = vrot.slane %v153, 1
    %v155 = vadd.f32 %v153, %v154
    %v156 = vsel %vm86, %v132, 0.0
    %v157 = vrot.slane %v156, 4
    %v158 = vadd.f32 %v156, %v157
    %v159 = vrot.slane %v158, 2
    %v160 = vadd.f32 %v158, %v159
    %v161 = vrot.slane %v160, 1
    %v162 = vadd.f32 %v160, %v161
    %v163 = vrcp.pop %v141
    %v164 = vmul.f32 1.0, %v163
    %v165 = vrcp.pop %v148
    %v166 = vmul.f32 1.0, %v165
    %v167 = vrcp.pop %v155
    %v168 = vmul.f32 1.0, %v167
    %v169 = vrcp.pop %v162
    %v170 = vmul.f32 1.0, %v169
    %v171 = vlaneseq
    %v172 = vshrl.u32 %v171, 7
    %v173 = vlaneseq
    %v174 = vshrl.u32 %v173, 7
    %v175 = vsub.s32 0, %v174
    %v176 = vrot.slane %v68, %v175
    %v177 = vlaneseq
    %v178 = vshrl.u32 %v177, 7
    %v179 = vsub.s32 1, %v178
    %v180 = vrot.slane %v68, %v179
    %v181 = vlaneseq
    %v182 = vshrl.u32 %v181, 7
    %v183 = vsub.s32 0, %v182
    %v184 = vrot.slane %v69, %v183
    %v185 = vlaneseq
    %v186 = vshrl.u32 %v185, 7
    %v187 = vsub.s32 1, %v186
    %v188 = vrot.slane %v69, %v187
    %vm189 = vcmp.eq.s32.totalorder %v172, %v176
    %vm190 = vcmp.eq.s32.totalorder %v172, %v180
    %vm191 = vcmp.eq.s32.totalorder %v172, %v184
    %vm192 = vcmp.eq.s32.totalorder %v172, %v188
    %v193 = vsel %vm78, 1, 0
    %v194 = vsel %vm79, 1, 0
    %vm195 = vcmp.eq.s32.totalorder %v193, 1
    %vm196 = vcmp.eq.s32.totalorder %v194, 1
    %vm197 = vmand %vm189, %vm195
    %vm198 = vmand %vm190, %vm196
    %vm199 = vmand %vm191, %vm195
    %vm200 = vmand %vm192, %vm196
    %v201 = vsel %vm197, %v126, 0.0
    %v202 = vsel %vm198, %v131, 0.0
    %v203 = vsel %vm199, %v128, 0.0
    %v204 = vsel %vm200, %v132, 0.0
    %v205 = vsel %vm86, %v201, 0.0
    %v206 = vrot.slane %v205, 4
    %v207 = vadd.f32 %v205, %v206
    %v208 = vrot.slane %v207, 2
    %v209 = vadd.f32 %v207, %v208
    %v210 = vrot.slane %v209, 1
    %v211 = vadd.f32 %v209, %v210
    %v212 = vsel %vm86, %v202, 0.0
    %v213 = vrot.slane %v212, 4
    %v214 = vadd.f32 %v212, %v213
    %v215 = vrot.slane %v214, 2
    %v216 = vadd.f32 %v214, %v215
    %v217 = vrot.slane %v216, 1
    %v218 = vadd.f32 %v216, %v217
    %v219 = vsel %vm86, %v203, 0.0
    %v220 = vrot.slane %v219, 4
    %v221 = vadd.f32 %v219, %v220
    %v222 = vrot.slane %v221, 2
    %v223 = vadd.f32 %v221, %v222
    %v224 = vrot.slane %v223, 1
    %v225 = vadd.f32 %v223, %v224
    %v226 = vsel %vm86, %v204, 0.0
    %v227 = vrot.slane %v226, 4
    %v228 = vadd.f32 %v226, %v227
    %v229 = vrot.slane %v228, 2
    %v230 = vadd.f32 %v228, %v229
    %v231 = vrot.slane %v230, 1
    %v232 = vadd.f32 %v230, %v231
    %v233 = vmul.f32 %v211, %v164
    %v234 = vmul.f32 %v218, %v166
    %v235 = vmul.f32 %v225, %v168
    %v236 = vmul.f32 %v232, %v170
    %v237 = vsel %vm195, %v233, 0.0
    %v238 = vsel %vm196, %v234, 0.0
    %v239 = vsel %vm195, %v235, 0.0
    %v240 = vsel %vm196, %v236, 0.0
    %v241 = vld [vmem:[#allocation2] sm:$0x1]
    %v242 = vld [vmem:[#allocation2 + $0x1] sm:$0x1]
    %v243 = vadd.f32 %v237, %v238
    %244 = vadd.xlane.f32.xlu0 %v243
    %v245 = vpop.xlane.xlu0 %244
    %v246 = vadd.f32 %v239, %v240
    %247 = vadd.xlane.f32.xlu0 %v246
    %v248 = vpop.xlane.xlu0 %247
    %v249 = vadd.f32 %v241, %v245
    %v250 = vadd.f32 %v242, %v248
    %vm251 = vcmask 0
    %252 = vst.msk [vmem:[#allocation2] sm:$0x1] %vm251, %v249
    %253 = vst.msk [vmem:[#allocation2 + $0x1] sm:$0x1] %vm251, %v250
    // Predicated region
    $region22: #{tpu_custom_call.1} parent=1 // pred_check
      %p254 = pneg %p59
    $region23: #{tpu_custom_call.1} parent=1 // pred_check_branch
      %256 = sbr.rel (%p254) target = $region25
    $region24: #{tpu_custom_call.1} parent=1 // pred_region
      %v257 = vld [vmem:[#allocation2] sm:$0x1]
      %v258 = vld [vmem:[#allocation2 + $0x1] sm:$0x1]
      %259 = vst.msk [vmem:[%s2] sm:$0x1] %vm251, %v257
      %260 = vst.msk [vmem:[%s2 + $0x1] sm:$0x1] %vm251, %v258
    $region25: #{tpu_custom_call.1} parent=1 // pred_fallthru
      _
    // Predicated region
    $region26: #{tpu_custom_call.1} parent=1 // pred_check
      _
    $region27: #{tpu_custom_call.1} parent=1 // pred_check_branch
      %262 = sbr.rel (0) target = $region29
    $region28: #{tpu_custom_call.1} parent=1 // pred_region
      _
    $region29: #{tpu_custom_call.1} parent=1 // pred_fallthru
      _
    // Predicated region
    $region30: #{tpu_custom_call.1} parent=1 // pred_check
      _
    $region31: #{tpu_custom_call.1} parent=1 // pred_check_branch
      %264 = sbr.rel (0) target = $region33
    $region32: #{tpu_custom_call.1} parent=1 // pred_region
      _
    $region33: #{tpu_custom_call.1} parent=1 // pred_fallthru
      _
    %265 = vsyncpa [#allocation4], 1
    %266 = vsyncpa [#allocation6], 1

</llo_original>
